<compile_context>
chip_gen: v5e
topology: v5e:2x2
jax: 0.10.0
libtpu: 0.0.40
codegen_flags: <defaults>
</compile_context>

<pallas_src>
import functools

import jax
import jax.numpy as jnp
from jax.experimental import pallas as pl
from jax.experimental.pallas import tpu as pltpu

LANE = 128
SUBLANE = 8


def _round_up(x, m):
    return (x + m - 1) // m * m


# ---------------------------------------------------------------------------
# Parameter preparation — hoisted out of the hot path; call once per module.
# ---------------------------------------------------------------------------
def prepare_cell_params(weight_ih, weight_hh, bias_ih, bias_hh, *, dtype=jnp.float32):
    """Fused, lane-aligned weight/bias for the single-step kernel.

    Returns (w_fused, b_fused, meta):
      w_fused : (Hp + I, 4*Hp)  rows = [h_pad | x], cols = [r | z | i_n | h_n]
      b_fused : (1, 4*Hp)       [b_r(ih+hh) | b_z(ih+hh) | b_ih_n | b_hh_n]
    Each gate occupies its own Hp = round_up(H, 128) lane block.
    NOTE: bias_ih_n and bias_hh_n are NOT summed (reset gate scales only h_n).
    """
    threeH, I = weight_ih.shape
    H = threeH // 3
    Hp = _round_up(H, LANE)
    K = Hp + I

    wih_t = jnp.asarray(weight_ih, dtype).T            # (I, 3H)
    whh_t = jnp.asarray(weight_hh, dtype).T            # (H, 3H)
    bih = jnp.asarray(bias_ih, dtype)
    bhh = jnp.asarray(bias_hh, dtype)

    w = jnp.zeros((K, 4 * Hp), dtype)
    # r gate
    w = w.at[0:H, 0:H].set(whh_t[:, 0:H])
    w = w.at[Hp:Hp + I, 0:H].set(wih_t[:, 0:H])
    # z gate
    w = w.at[0:H, Hp:Hp + H].set(whh_t[:, H:2 * H])
    w = w.at[Hp:Hp + I, Hp:Hp + H].set(wih_t[:, H:2 * H])
    # i_n (input-side new-state: only x rows)
    w = w.at[Hp:Hp + I, 2 * Hp:2 * Hp + H].set(wih_t[:, 2 * H:3 * H])
    # h_n (hidden-side new-state: only h rows)
    w = w.at[0:H, 3 * Hp:3 * Hp + H].set(whh_t[:, 2 * H:3 * H])

    b = jnp.zeros((1, 4 * Hp), dtype)
    b = b.at[0, 0:H].set(bih[0:H] + bhh[0:H])                  # r
    b = b.at[0, Hp:Hp + H].set(bih[H:2 * H] + bhh[H:2 * H])    # z
    b = b.at[0, 2 * Hp:2 * Hp + H].set(bih[2 * H:3 * H])       # i_n (kept separate)
    b = b.at[0, 3 * Hp:3 * Hp + H].set(bhh[2 * H:3 * H])       # h_n (kept separate)

    return w, b, dict(I=I, H=H, Hp=Hp)


def prepare_seq_params(weight_ih, weight_hh, bias_ih, bias_hh, *, dtype=jnp.float32):
    """Lane-aligned per-gate weights for the fused-sequence kernel.

    wih_pad/bih_pad feed the one-shot input projection (big GEMM outside the
    recurrent kernel); whh_pad/bhh_pad are used inside the kernel every step.
    Gate order along 3*Hp: [r | z | n], each in its own Hp lane block.
    """
    threeH, I = weight_ih.shape
    H = threeH // 3
    Hp = _round_up(H, LANE)

    wih_t = jnp.asarray(weight_ih, dtype).T
    whh_t = jnp.asarray(weight_hh, dtype).T
    bih = jnp.asarray(bias_ih, dtype)
    bhh = jnp.asarray(bias_hh, dtype)

    wih_pad = jnp.zeros((I, 3 * Hp), dtype)
    whh_pad = jnp.zeros((Hp, 3 * Hp), dtype)
    bih_pad = jnp.zeros((1, 3 * Hp), dtype)
    bhh_pad = jnp.zeros((1, 3 * Hp), dtype)
    for gate in range(3):
        cs, csp = gate * H, gate * Hp
        wih_pad = wih_pad.at[:, csp:csp + H].set(wih_t[:, cs:cs + H])
        whh_pad = whh_pad.at[0:H, csp:csp + H].set(whh_t[:, cs:cs + H])
        bih_pad = bih_pad.at[0, csp:csp + H].set(bih[cs:cs + H])
        bhh_pad = bhh_pad.at[0, csp:csp + H].set(bhh[cs:cs + H])

    return wih_pad, bih_pad, whh_pad, bhh_pad, dict(I=I, H=H, Hp=Hp)


# ---------------------------------------------------------------------------
# Single-step kernel (the module's forward).
# ---------------------------------------------------------------------------
def _augru_cell_kernel(xh_ref, att_ref, w_ref, b_ref, out_ref, *, Hp):
    # One fused MXU matmul: [h_pad | x] @ W_fused -> (TB, 4*Hp), lane-dense output.
    g = jnp.dot(xh_ref[...], w_ref[...], preferred_element_type=jnp.float32) + b_ref[...]

    r = jax.nn.sigmoid(g[:, 0:Hp])                     # lane-aligned gate slices
    z = jax.nn.sigmoid(g[:, Hp:2 * Hp])
    n = jnp.tanh(g[:, 2 * Hp:3 * Hp] + r * g[:, 3 * Hp:4 * Hp])

    h = xh_ref[:, 0:Hp]                                # h sits at lane offset 0
    u = att_ref[...] * z                               # attention-scaled update gate
    out_ref[...] = (h + u * (n - h)).astype(out_ref.dtype)   # == (1-u)*h + u*n


def augru_cell(inputs, hx, att_score, cell_params, *, block_b=256):
    """AUGRUCell.forward(inputs, hx, att_score) -> hy, via one Pallas call."""
    w_fused, b_fused, meta = cell_params
    I, H, Hp = meta["I"], meta["H"], meta["Hp"]
    B = inputs.shape[0]

    Bp = _round_up(B, SUBLANE)
    tb = Bp if Bp <= block_b else block_b
    Bp = _round_up(Bp, tb)
    K = Hp + I
    f32 = jnp.float32

    h_pad = jnp.zeros((Bp, Hp), f32).at[:B, :H].set(hx.astype(f32))
    x_pad = jnp.zeros((Bp, I), f32).at[:B, :].set(inputs.astype(f32))
    xh = jnp.concatenate([h_pad, x_pad], axis=1)                        # (Bp, Hp + I)
    att = jnp.zeros((Bp, 1), f32).at[:B, :].set(
        att_score.reshape(-1, 1).astype(f32))                           # .view(-1, 1)

    flops = 2 * Bp * K * 4 * Hp + 10 * Bp * Hp
    bytes_accessed = 4 * (Bp * K + Bp + K * 4 * Hp + 4 * Hp + Bp * Hp)
    cost = pl.CostEstimate(flops=flops, transcendentals=3 * Bp * Hp,
                           bytes_accessed=bytes_accessed)

    out = pl.pallas_call(
        functools.partial(_augru_cell_kernel, Hp=Hp),
        out_shape=jax.ShapeDtypeStruct((Bp, Hp), f32),
        grid=(Bp // tb,),
        in_specs=[
            pl.BlockSpec((tb, K), lambda b: (b, 0)),          # [h | x]
            pl.BlockSpec((tb, 1), lambda b: (b, 0)),          # att_score
            pl.BlockSpec((K, 4 * Hp), lambda b: (0, 0)),      # fused weight (constant)
            pl.BlockSpec((1, 4 * Hp), lambda b: (0, 0)),      # fused bias (constant)
        ],
        out_specs=pl.BlockSpec((tb, Hp), lambda b: (b, 0)),
        compiler_params=pltpu.CompilerParams(dimension_semantics=("parallel",)),
        cost_estimate=cost,
    )(xh, att, w_fused, b_fused)

    return out[:B, :H]


# ---------------------------------------------------------------------------
# Fused sequence kernel: the whole AUGRU recurrence in one pallas_call.
# ---------------------------------------------------------------------------
def _augru_seq_kernel(gi_ref, att_ref, h0_ref, whh_ref, bhh_ref, out_ref, h_scr, *, Hp):
    t = pl.program_id(1)

    @pl.when(t == 0)
    def _():
        h_scr[...] = h0_ref[...]          # load initial state once per batch block

    h = h_scr[...]
    # Only the hidden projection stays on the serial path (gi is precomputed).
    gh = jnp.dot(h, whh_ref[...], preferred_element_type=jnp.float32) + bhh_ref[...]
    gi = gi_ref[0]                        # (TB, 3*Hp)

    r = jax.nn.sigmoid(gi[:, 0:Hp] + gh[:, 0:Hp])
    z = jax.nn.sigmoid(gi[:, Hp:2 * Hp] + gh[:, Hp:2 * Hp])
    n = jnp.tanh(gi[:, 2 * Hp:3 * Hp] + r * gh[:, 2 * Hp:3 * Hp])

    u = att_ref[0] * z
    h_new = h + u * (n - h)
    h_scr[...] = h_new
    out_ref[0] = h_new.astype(out_ref.dtype)


def augru_sequence(x_seq, h0, att_seq, seq_params, *, block_b=256):
    """Apply AUGRUCell over a (T, B, I) sequence in a single fused kernel.

    Returns the full (T, B, H) sequence of hidden states (hy of each step).
    """
    wih_pad, bih_pad, whh_pad, bhh_pad, meta = seq_params
    I, H, Hp = meta["I"], meta["H"], meta["Hp"]
    T, B, _ = x_seq.shape

    Bp = _round_up(B, SUBLANE)
    tb = Bp if Bp <= block_b else block_b
    Bp = _round_up(Bp, tb)
    f32 = jnp.float32

    x_pad = jnp.zeros((T, Bp, I), f32).at[:, :B, :].set(x_seq.astype(f32))
    h0_pad = jnp.zeros((Bp, Hp), f32).at[:B, :H].set(h0.astype(f32))
    att_pad = jnp.zeros((T, Bp, 1), f32).at[:, :B, :].set(
        att_seq.reshape(T, B, 1).astype(f32))

    # One big MXU-friendly GEMM for the whole sequence's input projection.
    gi_all = jnp.einsum("tbi,ig->tbg", x_pad, wih_pad,
                        preferred_element_type=f32) + bih_pad          # (T, Bp, 3*Hp)

    out = pl.pallas_call(
        functools.partial(_augru_seq_kernel, Hp=Hp),
        out_shape=jax.ShapeDtypeStruct((T, Bp, Hp), f32),
        grid=(Bp // tb, T),                                            # t innermost
        in_specs=[
            pl.BlockSpec((1, tb, 3 * Hp), lambda b, t: (t, b, 0)),     # gi_t (streamed)
            pl.BlockSpec((1, tb, 1), lambda b, t: (t, b, 0)),          # att_t (streamed)
            pl.BlockSpec((tb, Hp), lambda b, t: (b, 0)),               # h0 (per b block)
            pl.BlockSpec((Hp, 3 * Hp), lambda b, t: (0, 0)),           # W_hh (loaded once)
            pl.BlockSpec((1, 3 * Hp), lambda b, t: (0, 0)),            # b_hh (loaded once)
        ],
        out_specs=pl.BlockSpec((1, tb, Hp), lambda b, t: (t, b, 0)),
        scratch_shapes=[pltpu.VMEM((tb, Hp), f32)],                    # resident hidden state
        compiler_params=pltpu.CompilerParams(
            dimension_semantics=("parallel", "arbitrary")),
    )(gi_all, att_pad, h0_pad, whh_pad, bhh_pad)

    return out[:, :B, :H]


# ---------------------------------------------------------------------------
# Pure-JAX reference mirroring the PyTorch forward exactly.
# ---------------------------------------------------------------------------
def augru_cell_ref(inputs, hx, att_score, weight_ih, weight_hh, bias_ih, bias_hh):
    H = hx.shape[-1]
    gi = inputs @ weight_ih.T + bias_ih
    gh = hx @ weight_hh.T + bias_hh
    i_r, i_z, i_n = gi[:, 0:H], gi[:, H:2 * H], gi[:, 2 * H:3 * H]
    h_r, h_z, h_n = gh[:, 0:H], gh[:, H:2 * H], gh[:, 2 * H:3 * H]
    reset_gate = jax.nn.sigmoid(i_r + h_r)
    update_gate = jax.nn.sigmoid(i_z + h_z)
    new_state = jnp.tanh(i_n + reset_gate * h_n)
    update_gate = att_score.reshape(-1, 1) * update_gate
    return (1.0 - update_gate) * hx + update_gate * new_state


if __name__ == "__main__":
    INPUT_SIZE = 16
    HIDDEN_SIZE = 32
    BATCH = 8
    SEQ = 8

    key = jax.random.PRNGKey(0)
    ks = jax.random.split(key, 9)

    inputs = jax.random.normal(ks[0], (BATCH, INPUT_SIZE), dtype=jnp.float32)
    hx = jax.random.normal(ks[1], (BATCH, HIDDEN_SIZE), dtype=jnp.float32)
    att_score = jax.random.uniform(ks[2], (BATCH,), dtype=jnp.float32)

    weight_ih = 0.1 * jax.random.normal(ks[3], (3 * HIDDEN_SIZE, INPUT_SIZE), dtype=jnp.float32)
    weight_hh = 0.1 * jax.random.normal(ks[4], (3 * HIDDEN_SIZE, HIDDEN_SIZE), dtype=jnp.float32)
    bias_ih = 0.05 * jax.random.normal(ks[5], (3 * HIDDEN_SIZE,), dtype=jnp.float32)
    bias_hh = 0.05 * jax.random.normal(ks[6], (3 * HIDDEN_SIZE,), dtype=jnp.float32)

    # ---- single step: exactly the module's forward -------------------------
    cell_params = prepare_cell_params(weight_ih, weight_hh, bias_ih, bias_hh)
    hy = jax.block_until_ready(augru_cell(inputs, hx, att_score, cell_params))
    hy_ref = augru_cell_ref(inputs, hx, att_score, weight_ih, weight_hh, bias_ih, bias_hh)
    assert hy.shape == (BATCH, HIDDEN_SIZE)
    assert jnp.allclose(hy, hy_ref, atol=2e-5, rtol=2e-5), "single-step mismatch vs reference"

    # ---- fused sequence: AUGRUCell applied over T steps with h in VMEM -----
    x_seq = jax.random.normal(ks[7], (SEQ, BATCH, INPUT_SIZE), dtype=jnp.float32)
    att_seq = jax.random.uniform(ks[8], (SEQ, BATCH), dtype=jnp.float32)
    seq_params = prepare_seq_params(weight_ih, weight_hh, bias_ih, bias_hh)
    hy_seq = jax.block_until_ready(augru_sequence(x_seq, hx, att_seq, seq_params))

    h = hx
    ref_steps = []
    for t in range(SEQ):
        h = augru_cell_ref(x_seq[t], h, att_seq[t], weight_ih, weight_hh, bias_ih, bias_hh)
        ref_steps.append(h)
    hy_seq_ref = jnp.stack(ref_steps, axis=0)
    assert hy_seq.shape == (SEQ, BATCH, HIDDEN_SIZE)
    assert jnp.allclose(hy_seq, hy_seq_ref, atol=1e-4, rtol=1e-4), "sequence mismatch vs reference"

    print("KERNEL_OK")
</pallas_src>

<mosaic_0001>
module attributes {stable_mosaic.version = 11 : i64} {
  func.func @_augru_cell_kernel(%arg0: i32, %arg1: memref<8x144xf32, #tpu.memory_space<vmem>>, %arg2: memref<8x1xf32, #tpu.memory_space<vmem>>, %arg3: memref<144x512xf32, #tpu.memory_space<vmem>>, %arg4: memref<1x512xf32, #tpu.memory_space<vmem>>, %arg5: memref<8x128xf32, #tpu.memory_space<vmem>>) attributes {dimension_semantics = [#tpu.dimension_semantics<parallel>], iteration_bounds = array<i64: 1>, scalar_prefetch = 0 : i64, scratch_operands = 0 : i64, tpu.core_type = #tpu.core_type<tc>, window_params = [{transform_indices = @transform_0, window_bounds = array<i64: 8, 144>}, {transform_indices = @transform_1, window_bounds = array<i64: 8, 1>}, {pipeline_mode = #tpu.pipeline_mode<synchronous>, transform_indices = @transform_2, window_bounds = array<i64: 144, 512>}, {pipeline_mode = #tpu.pipeline_mode<synchronous>, transform_indices = @transform_3, window_bounds = array<i64: 1, 512>}, {transform_indices = @transform_4, window_bounds = array<i64: 8, 128>}]} {
    %c0 = arith.constant 0 : index
    %c0_0 = arith.constant 0 : index
    %0 = vector.load %arg1[%c0, %c0_0] : memref<8x144xf32, #tpu.memory_space<vmem>>, vector<8x144xf32>
    %c0_1 = arith.constant 0 : index
    %c0_2 = arith.constant 0 : index
    %1 = vector.load %arg3[%c0_1, %c0_2] : memref<144x512xf32, #tpu.memory_space<vmem>>, vector<144x512xf32>
    %cst = arith.constant dense<0.000000e+00> : vector<8x512xf32>
    %2 = tpu.matmul %0, %1, %cst {dimension_numbers = #tpu.dot_dimension_numbers<[1], [0], [0], [1], [0, 0, 1, 1], [], []>} : vector<8x144xf32>, vector<144x512xf32>, vector<8x512xf32> -> vector<8x512xf32>
    %c0_3 = arith.constant 0 : index
    %c0_4 = arith.constant 0 : index
    %3 = vector.load %arg4[%c0_3, %c0_4] : memref<1x512xf32, #tpu.memory_space<vmem>>, vector<1x512xf32>
    %4 = vector.broadcast %3 : vector<1x512xf32> to vector<8x512xf32>
    %5 = arith.addf %2, %4 : vector<8x512xf32>
    %6 = vector.extract_strided_slice %5 {offsets = [0, 0], sizes = [8, 128], strides = [1, 1]} : vector<8x512xf32> to vector<8x128xf32>
    %7 = arith.negf %6 : vector<8x128xf32>
    %8 = math.exp %7 : vector<8x128xf32>
    %cst_5 = arith.constant 1.000000e+00 : f32
    %9 = vector.broadcast %cst_5 : f32 to vector<8x128xf32>
    %10 = arith.addf %9, %8 : vector<8x128xf32>
    %11 = arith.divf %9, %10 : vector<8x128xf32>
    %12 = vector.extract_strided_slice %5 {offsets = [0, 128], sizes = [8, 128], strides = [1, 1]} : vector<8x512xf32> to vector<8x128xf32>
    %13 = arith.negf %12 : vector<8x128xf32>
    %14 = math.exp %13 : vector<8x128xf32>
    %cst_6 = arith.constant 1.000000e+00 : f32
    %15 = vector.broadcast %cst_6 : f32 to vector<8x128xf32>
    %16 = arith.addf %15, %14 : vector<8x128xf32>
    %17 = arith.divf %15, %16 : vector<8x128xf32>
    %18 = vector.extract_strided_slice %5 {offsets = [0, 256], sizes = [8, 128], strides = [1, 1]} : vector<8x512xf32> to vector<8x128xf32>
    %19 = vector.extract_strided_slice %5 {offsets = [0, 384], sizes = [8, 128], strides = [1, 1]} : vector<8x512xf32> to vector<8x128xf32>
    %20 = arith.mulf %11, %19 : vector<8x128xf32>
    %21 = arith.addf %18, %20 : vector<8x128xf32>
    %22 = math.tanh %21 : vector<8x128xf32>
    %c0_7 = arith.constant 0 : index
    %c0_8 = arith.constant 0 : index
    %23 = vector.load %arg1[%c0_7, %c0_8] : memref<8x144xf32, #tpu.memory_space<vmem>>, vector<8x128xf32>
    %c0_9 = arith.constant 0 : index
    %c0_10 = arith.constant 0 : index
    %24 = vector.load %arg2[%c0_9, %c0_10] : memref<8x1xf32, #tpu.memory_space<vmem>>, vector<8x1xf32>
    %25 = vector.broadcast %24 : vector<8x1xf32> to vector<8x128xf32>
    %26 = arith.mulf %25, %17 : vector<8x128xf32>
    %27 = arith.subf %22, %23 : vector<8x128xf32>
    %28 = arith.mulf %26, %27 : vector<8x128xf32>
    %29 = arith.addf %23, %28 : vector<8x128xf32>
    %c0_11 = arith.constant 0 : index
    %c0_12 = arith.constant 0 : index
    %30 = vector.load %arg5[%c0_11, %c0_12] : memref<8x128xf32, #tpu.memory_space<vmem>>, vector<8x128xf32>
    tpu.vector_store %arg5[%c0_11, %c0_12], %29 {strides = array<i32>} : memref<8x128xf32, #tpu.memory_space<vmem>>, vector<8x128xf32>,
    return
  }
  func.func @transform_0(%arg0: i32) -> (i32, i32) {
    %c0_i32 = arith.constant 0 : i32
    %c0_i32_0 = arith.constant 0 : i32
    return %arg0, %c0_i32 : i32, i32
  }
  func.func @transform_1(%arg0: i32) -> (i32, i32) {
    %c0_i32 = arith.constant 0 : i32
    %c0_i32_0 = arith.constant 0 : i32
    return %arg0, %c0_i32 : i32, i32
  }
  func.func @transform_2(%arg0: i32) -> (i32, i32) {
    %c0_i32 = arith.constant 0 : i32
    %c0_i32_0 = arith.constant 0 : i32
    %c0_i32_1 = arith.constant 0 : i32
    return %c0_i32, %c0_i32_0 : i32, i32
  }
  func.func @transform_3(%arg0: i32) -> (i32, i32) {
    %c0_i32 = arith.constant 0 : i32
    %c0_i32_0 = arith.constant 0 : i32
    %c0_i32_1 = arith.constant 0 : i32
    return %c0_i32, %c0_i32_0 : i32, i32
  }
  func.func @transform_4(%arg0: i32) -> (i32, i32) {
    %c0_i32 = arith.constant 0 : i32
    %c0_i32_0 = arith.constant 0 : i32
    return %arg0, %c0_i32 : i32, i32
  }
}

</mosaic_0001>

<llo_original>
// kernel: tpu_custom_call.1
$region0: #{tpu_custom_call.1}
  #allocation0 [shape = 'u32[]', space=smem, size = 0x4, offset = 0x4, fixed_abs, tag = 'smem constant byte address 0x4 - core index']
  #allocation1 [shape = 'u32[72,128]{1,0:T(1,128)}', space=vmem, size = 0x9000, scoped, tag = 'internal scratch']
  %s0 = inlined_call_operand.hbm [shape: f32[8,144], index: 0, kind: input, shape index: {}]
  %s1 = inlined_call_operand.vmem [shape: f32[8,1], index: 1, kind: input, shape index: {}]
  %s2 = inlined_call_operand.hbm [shape: f32[144,512], index: 2, kind: input, shape index: {}]
  %s3 = inlined_call_operand.vmem [shape: f32[1,512], index: 3, kind: input, shape index: {}]
  %s4 = inlined_call_operand.hbm [shape: f32[8,128], index: 4, kind: output, shape index: {}]
  %s5 = sld [smem:[#allocation0]]
  $region34: #{tpu_custom_call.1} parent=0
    _
  %s7 = ssub.s32 1, %s5
  %s8 = scalar_select 0, %s7, %s5
  $region1: #{tpu_custom_call.1} parent=0
    #allocation2 [shape = 'u8[8192]{0}', space=vmem, size = 0x2000, scoped, tag = 'input window, operand 0, single buffered']
    #allocation3 [shape = 's32[1]{0}', space=sflag, size = 0x4, scoped, tag = 'scoped memory for tpu_custom_call.1']
    #allocation4 [shape = 's32[1]{0}', space=sflag, size = 0x4, scoped, tag = 'scoped memory for tpu_custom_call.1']
    #allocation5 [shape = 'u8[294912]{0}', space=vmem, size = 0x48000, scoped, tag = 'input window, operand 2, single buffered']
    #allocation6 [shape = 's32[1]{0}', space=sflag, size = 0x4, scoped, tag = 'scoped memory for tpu_custom_call.1']
    #allocation7 [shape = 'u8[4096]{0}', space=vmem, size = 0x1000, scoped, tag = 'output window, operand 0, single buffered']
    %9 = vsyncpa [#allocation3], 0
    %10 = vsyncpa [#allocation6], 0
    %11 = vsyncpa [#allocation4], 0
    // Predicated region
    $region2: #{tpu_custom_call.1} parent=1 // pred_check
      _
    $region3: #{tpu_custom_call.1} parent=1 // pred_check_branch
      %13 = sbr.rel (0) target = $region5
    $region4: #{tpu_custom_call.1} parent=1 // pred_region
      %15 = vsyncadd [#allocation3], 0
      %s17 = sshll.u32 %s0, 4
      %s18 = int_to_ptr.hbm [resolvable:$true] %s17
      %s19 = sshll.u32 [#allocation2], 4
      %s20 = int_to_ptr.vmem [resolvable:$true] %s19
      %22 = dma.hbm_to_vmem [thread:$0]  %s18, 256, %s20, [#allocation3]
    $region5: #{tpu_custom_call.1} parent=1 // pred_fallthru
      _
    // Predicated region
    $region6: #{tpu_custom_call.1} parent=1 // pred_check
      _
    $region7: #{tpu_custom_call.1} parent=1 // pred_check_branch
      %24 = sbr.rel (0) target = $region9
    $region8: #{tpu_custom_call.1} parent=1 // pred_region
      _
    $region9: #{tpu_custom_call.1} parent=1 // pred_fallthru
      _
    // Predicated region
    $region10: #{tpu_custom_call.1} parent=1 // pred_check
      _
    $region11: #{tpu_custom_call.1} parent=1 // pred_check_branch
      %26 = sbr.rel (0) target = $region13
    $region12: #{tpu_custom_call.1} parent=1 // pred_region
      %28 = vsyncadd [#allocation6], 0
      %s29 = sshll.u32 %s2, 4
      %s30 = int_to_ptr.hbm [resolvable:$true] %s29
      %s31 = sshll.u32 [#allocation5], 4
      %s32 = int_to_ptr.vmem [resolvable:$true] %s31
      %37 = dma.hbm_to_vmem [thread:$0]  %s30, 9216, %s32, [#allocation6], 512, 512, 32
    $region13: #{tpu_custom_call.1} parent=1 // pred_fallthru
      _
    // Predicated region
    $region14: #{tpu_custom_call.1} parent=1 // pred_check
      _
    $region15: #{tpu_custom_call.1} parent=1 // pred_check_branch
      %39 = sbr.rel (0) target = $region17
    $region16: #{tpu_custom_call.1} parent=1 // pred_region
      _
    $region17: #{tpu_custom_call.1} parent=1 // pred_fallthru
      _
    // Predicated region
    $region18: #{tpu_custom_call.1} parent=1 // pred_check
      _
    $region19: #{tpu_custom_call.1} parent=1 // pred_check_branch
      %41 = sbr.rel (0) target = $region21
    $region20: #{tpu_custom_call.1} parent=1 // pred_region
      %43 = dma.done [#allocation3], 256
    $region21: #{tpu_custom_call.1} parent=1 // pred_fallthru
      _
    // Predicated region
    $region22: #{tpu_custom_call.1} parent=1 // pred_check
      _
    $region23: #{tpu_custom_call.1} parent=1 // pred_check_branch
      %45 = sbr.rel (0) target = $region25
    $region24: #{tpu_custom_call.1} parent=1 // pred_region
      %47 = dma.done [#allocation6], 9216
    $region25: #{tpu_custom_call.1} parent=1 // pred_fallthru
      _
    %v48 = vld [vmem:[#allocation2] sm:$0xff]
    %v49 = vld [vmem:[#allocation2 + $0x8] sm:$0xff]
    %v50 = vld [vmem:[#allocation5] sm:$0xff]
    %v51 = vld [vmem:[#allocation5 + $0x8] sm:$0xff]
    %v52 = vld [vmem:[#allocation5 + $0x10] sm:$0xff]
    %v53 = vld [vmem:[#allocation5 + $0x18] sm:$0xff]
    %v54 = vld [vmem:[#allocation5 + $0x20] sm:$0xff]
    %v55 = vld [vmem:[#allocation5 + $0x28] sm:$0xff]
    %v56 = vld [vmem:[#allocation5 + $0x30] sm:$0xff]
    %v57 = vld [vmem:[#allocation5 + $0x38] sm:$0xff]
    %v58 = vld [vmem:[#allocation5 + $0x40] sm:$0xff]
    %v59 = vld [vmem:[#allocation5 + $0x48] sm:$0xff]
    %v60 = vld [vmem:[#allocation5 + $0x50] sm:$0xff]
    %v61 = vld [vmem:[#allocation5 + $0x58] sm:$0xff]
    %v62 = vld [vmem:[#allocation5 + $0x60] sm:$0xff]
    %v63 = vld [vmem:[#allocation5 + $0x68] sm:$0xff]
    %v64 = vld [vmem:[#allocation5 + $0x70] sm:$0xff]
    %v65 = vld [vmem:[#allocation5 + $0x78] sm:$0xff]
    %v66 = vld [vmem:[#allocation5 + $0x80] sm:$0xff]
    %v67 = vld [vmem:[#allocation5 + $0x88] sm:$0xff]
    %v68 = vld [vmem:[#allocation5 + $0x90] sm:$0xff]
    %v69 = vld [vmem:[#allocation5 + $0x98] sm:$0xff]
    %v70 = vld [vmem:[#allocation5 + $0xa0] sm:$0xff]
    %v71 = vld [vmem:[#allocation5 + $0xa8] sm:$0xff]
    %v72 = vld [vmem:[#allocation5 + $0xb0] sm:$0xff]
    %v73 = vld [vmem:[#allocation5 + $0xb8] sm:$0xff]
    %v74 = vld [vmem:[#allocation5 + $0xc0] sm:$0xff]
    %v75 = vld [vmem:[#allocation5 + $0xc8] sm:$0xff]
    %v76 = vld [vmem:[#allocation5 + $0xd0] sm:$0xff]
    %v77 = vld [vmem:[#allocation5 + $0xd8] sm:$0xff]
    %v78 = vld [vmem:[#allocation5 + $0xe0] sm:$0xff]
    %v79 = vld [vmem:[#allocation5 + $0xe8] sm:$0xff]
    %v80 = vld [vmem:[#allocation5 + $0xf0] sm:$0xff]
    %v81 = vld [vmem:[#allocation5 + $0xf8] sm:$0xff]
    %v82 = vld [vmem:[#allocation5 + $0x100] sm:$0xff]
    %v83 = vld [vmem:[#allocation5 + $0x108] sm:$0xff]
    %v84 = vld [vmem:[#allocation5 + $0x110] sm:$0xff]
    %v85 = vld [vmem:[#allocation5 + $0x118] sm:$0xff]
    %v86 = vld [vmem:[#allocation5 + $0x120] sm:$0xff]
    %v87 = vld [vmem:[#allocation5 + $0x128] sm:$0xff]
    %v88 = vld [vmem:[#allocation5 + $0x130] sm:$0xff]
    %v89 = vld [vmem:[#allocation5 + $0x138] sm:$0xff]
    %v90 = vld [vmem:[#allocation5 + $0x140] sm:$0xff]
    %v91 = vld [vmem:[#allocation5 + $0x148] sm:$0xff]
    %v92 = vld [vmem:[#allocation5 + $0x150] sm:$0xff]
    %v93 = vld [vmem:[#allocation5 + $0x158] sm:$0xff]
    %v94 = vld [vmem:[#allocation5 + $0x160] sm:$0xff]
    %v95 = vld [vmem:[#allocation5 + $0x168] sm:$0xff]
    %v96 = vld [vmem:[#allocation5 + $0x170] sm:$0xff]
    %v97 = vld [vmem:[#allocation5 + $0x178] sm:$0xff]
    %v98 = vld [vmem:[#allocation5 + $0x180] sm:$0xff]
    %v99 = vld [vmem:[#allocation5 + $0x188] sm:$0xff]
    %v100 = vld [vmem:[#allocation5 + $0x190] sm:$0xff]
    %v101 = vld [vmem:[#allocation5 + $0x198] sm:$0xff]
    %v102 = vld [vmem:[#allocation5 + $0x1a0] sm:$0xff]
    %v103 = vld [vmem:[#allocation5 + $0x1a8] sm:$0xff]
    %v104 = vld [vmem:[#allocation5 + $0x1b0] sm:$0xff]
    %v105 = vld [vmem:[#allocation5 + $0x1b8] sm:$0xff]
    %v106 = vld [vmem:[#allocation5 + $0x1c0] sm:$0xff]
    %v107 = vld [vmem:[#allocation5 + $0x1c8] sm:$0xff]
    %v108 = vld [vmem:[#allocation5 + $0x1d0] sm:$0xff]
    %v109 = vld [vmem:[#allocation5 + $0x1d8] sm:$0xff]
    %v110 = vld [vmem:[#allocation5 + $0x1e0] sm:$0xff]
    %v111 = vld [vmem:[#allocation5 + $0x1e8] sm:$0xff]
    %v112 = vld [vmem:[#allocation5 + $0x1f0] sm:$0xff]
    %v113 = vld [vmem:[#allocation5 + $0x1f8] sm:$0xff]
    %v114 = vld [vmem:[#allocation5 + $0x200] sm:$0xff]
    %v115 = vld [vmem:[#allocation5 + $0x208] sm:$0xff]
    %v116 = vld [vmem:[#allocation5 + $0x210] sm:$0xff]
    %v117 = vld [vmem:[#allocation5 + $0x218] sm:$0xff]
    %v118 = vld [vmem:[#allocation5 + $0x220] sm:$0xff]
    %v119 = vld [vmem:[#allocation5 + $0x228] sm:$0xff]
    %v120 = vld [vmem:[#allocation5 + $0x230] sm:$0xff]
    %v121 = vld [vmem:[#allocation5 + $0x238] sm:$0xff]
    %v122 = vld [vmem:[%s3] sm:$0xf]
    %v124 = vperm.slane %v122, 0
    %v125 = vperm.slane %v122, 1
    %v126 = vperm.slane %v122, 2
    %v127 = vperm.slane %v122, 3
    %vm132 = vcmask 130048
    %v134 = vsel %vm132, %v49, 0
    %136 = vmatpush.msra.mxu0 %v110
    %137 = vmatpush.msra.mxu0 %v106
    %138 = vmatpush.msra.mxu0 %v102
    %139 = vmatpush.msra.mxu0 %v98
    %140 = vmatpush.msra.mxu0 %v94
    %141 = vmatpush.msra.mxu0 %v90
    %142 = vmatpush.msra.mxu0 %v86
    %143 = vmatpush.msra.mxu0 %v82
    %144 = vmatpush.msra.mxu0 %v78
    %145 = vmatpush.msra.mxu0 %v74
    %146 = vmatpush.msra.mxu0 %v70
    %147 = vmatpush.msra.mxu0 %v66
    %148 = vmatpush.msra.mxu0 %v62
    %149 = vmatpush.msra.mxu0 %v58
    %150 = vmatpush.msra.mxu0 %v54
    %151 = vmatpush.msra.mxu0 %v50
    %152 = vmatmul.f32.gmra.mxu0 %v48
    %v153 = vpop.f32.mrf.mxu0
    %v154 = vadd.f32 %v124, %v153
    %155 = vdwg.mxu0
    %156 = vmatpush.msra.mxu0 0.0
    %157 = vmatpush.msra.mxu0 0.0
    %158 = vmatpush.msra.mxu0 0.0
    %159 = vmatpush.msra.mxu0 0.0
    %160 = vmatpush.msra.mxu0 0.0
    %161 = vmatpush.msra.mxu0 0.0
    %162 = vmatpush.msra.mxu0 0.0
    %163 = vmatpush.msra.mxu0 0.0
    %164 = vmatpush.msra.mxu0 0.0
    %165 = vmatpush.msra.mxu0 0.0
    %166 = vmatpush.msra.mxu0 0.0
    %167 = vmatpush.msra.mxu0 0.0
    %168 = vmatpush.msra.mxu0 0.0
    %169 = vmatpush.msra.mxu0 0.0
    %170 = vmatpush.msra.mxu0 %v118
    %171 = vmatpush.msra.mxu0 %v114
    %172 = vmatmul.f32.gmra.mxu0 %v134
    %v173 = vpop.f32.mrf.mxu0
    %v174 = vadd.f32 %v154, %v173
    %175 = vdwg.mxu0
    %176 = vmatpush.msra.mxu0 %v111
    %177 = vmatpush.msra.mxu0 %v107
    %178 = vmatpush.msra.mxu0 %v103
    %179 = vmatpush.msra.mxu0 %v99
    %180 = vmatpush.msra.mxu0 %v95
    %181 = vmatpush.msra.mxu0 %v91
    %182 = vmatpush.msra.mxu0 %v87
    %183 = vmatpush.msra.mxu0 %v83
    %184 = vmatpush.msra.mxu0 %v79
    %185 = vmatpush.msra.mxu0 %v75
    %186 = vmatpush.msra.mxu0 %v71
    %187 = vmatpush.msra.mxu0 %v67
    %188 = vmatpush.msra.mxu0 %v63
    %189 = vmatpush.msra.mxu0 %v59
    %190 = vmatpush.msra.mxu0 %v55
    %191 = vmatpush.msra.mxu0 %v51
    %192 = vmatmul.f32.gmra.mxu0 %v48
    %v193 = vpop.f32.mrf.mxu0
    %v194 = vadd.f32 %v125, %v193
    %195 = vdwg.mxu0
    %196 = vmatpush.msra.mxu0 0.0
    %197 = vmatpush.msra.mxu0 0.0
    %198 = vmatpush.msra.mxu0 0.0
    %199 = vmatpush.msra.mxu0 0.0
    %200 = vmatpush.msra.mxu0 0.0
    %201 = vmatpush.msra.mxu0 0.0
    %202 = vmatpush.msra.mxu0 0.0
    %203 = vmatpush.msra.mxu0 0.0
    %204 = vmatpush.msra.mxu0 0.0
    %205 = vmatpush.msra.mxu0 0.0
    %206 = vmatpush.msra.mxu0 0.0
    %207 = vmatpush.msra.mxu0 0.0
    %208 = vmatpush.msra.mxu0 0.0
    %209 = vmatpush.msra.mxu0 0.0
    %210 = vmatpush.msra.mxu0 %v119
    %211 = vmatpush.msra.mxu0 %v115
    %212 = vmatmul.f32.gmra.mxu0 %v134
    %v213 = vpop.f32.mrf.mxu0
    %v214 = vadd.f32 %v194, %v213
    %215 = vdwg.mxu0
    %216 = vmatpush.msra.mxu0 %v112
    %217 = vmatpush.msra.mxu0 %v108
    %218 = vmatpush.msra.mxu0 %v104
    %219 = vmatpush.msra.mxu0 %v100
    %220 = vmatpush.msra.mxu0 %v96
    %221 = vmatpush.msra.mxu0 %v92
    %222 = vmatpush.msra.mxu0 %v88
    %223 = vmatpush.msra.mxu0 %v84
    %224 = vmatpush.msra.mxu0 %v80
    %225 = vmatpush.msra.mxu0 %v76
    %226 = vmatpush.msra.mxu0 %v72
    %227 = vmatpush.msra.mxu0 %v68
    %228 = vmatpush.msra.mxu0 %v64
    %229 = vmatpush.msra.mxu0 %v60
    %230 = vmatpush.msra.mxu0 %v56
    %231 = vmatpush.msra.mxu0 %v52
    %232 = vmatmul.f32.gmra.mxu0 %v48
    %v233 = vpop.f32.mrf.mxu0
    %v234 = vadd.f32 %v126, %v233
    %235 = vdwg.mxu0
    %236 = vmatpush.msra.mxu0 0.0
    %237 = vmatpush.msra.mxu0 0.0
    %238 = vmatpush.msra.mxu0 0.0
    %239 = vmatpush.msra.mxu0 0.0
    %240 = vmatpush.msra.mxu0 0.0
    %241 = vmatpush.msra.mxu0 0.0
    %242 = vmatpush.msra.mxu0 0.0
    %243 = vmatpush.msra.mxu0 0.0
    %244 = vmatpush.msra.mxu0 0.0
    %245 = vmatpush.msra.mxu0 0.0
    %246 = vmatpush.msra.mxu0 0.0
    %247 = vmatpush.msra.mxu0 0.0
    %248 = vmatpush.msra.mxu0 0.0
    %249 = vmatpush.msra.mxu0 0.0
    %250 = vmatpush.msra.mxu0 %v120
    %251 = vmatpush.msra.mxu0 %v116
    %252 = vmatmul.f32.gmra.mxu0 %v134
    %v253 = vpop.f32.mrf.mxu0
    %v254 = vadd.f32 %v234, %v253
    %255 = vdwg.mxu0
    %256 = vmatpush.msra.mxu0 %v113
    %257 = vmatpush.msra.mxu0 %v109
    %258 = vmatpush.msra.mxu0 %v105
    %259 = vmatpush.msra.mxu0 %v101
    %260 = vmatpush.msra.mxu0 %v97
    %261 = vmatpush.msra.mxu0 %v93
    %262 = vmatpush.msra.mxu0 %v89
    %263 = vmatpush.msra.mxu0 %v85
    %264 = vmatpush.msra.mxu0 %v81
    %265 = vmatpush.msra.mxu0 %v77
    %266 = vmatpush.msra.mxu0 %v73
    %267 = vmatpush.msra.mxu0 %v69
    %268 = vmatpush.msra.mxu0 %v65
    %269 = vmatpush.msra.mxu0 %v61
    %270 = vmatpush.msra.mxu0 %v57
    %271 = vmatpush.msra.mxu0 %v53
    %272 = vmatmul.f32.gmra.mxu0 %v48
    %v273 = vpop.f32.mrf.mxu0
    %v274 = vadd.f32 %v127, %v273
    %275 = vdwg.mxu0
    %276 = vmatpush.msra.mxu0 0.0
    %277 = vmatpush.msra.mxu0 0.0
    %278 = vmatpush.msra.mxu0 0.0
    %279 = vmatpush.msra.mxu0 0.0
    %280 = vmatpush.msra.mxu0 0.0
    %281 = vmatpush.msra.mxu0 0.0
    %282 = vmatpush.msra.mxu0 0.0
    %283 = vmatpush.msra.mxu0 0.0
    %284 = vmatpush.msra.mxu0 0.0
    %285 = vmatpush.msra.mxu0 0.0
    %286 = vmatpush.msra.mxu0 0.0
    %287 = vmatpush.msra.mxu0 0.0
    %288 = vmatpush.msra.mxu0 0.0
    %289 = vmatpush.msra.mxu0 0.0
    %290 = vmatpush.msra.mxu0 %v121
    %291 = vmatpush.msra.mxu0 %v117
    %292 = vmatmul.f32.gmra.mxu0 %v134
    %v293 = vpop.f32.mrf.mxu0
    %v294 = vadd.f32 %v274, %v293
    %295 = vdwg.mxu0
    %v296 = vxor.u32 %v174, 2147483648
    %v297 = vmul.f32 %v296, 1.442695
    %v298 = vpow.pop %v297
    %v299 = vadd.f32 %v298, 1.0
    %v300 = vrcp.pop %v299
    %v301 = vmul.f32 %v299, %v300
    %v302 = vsub.f32 1.0, %v301
    %v303 = vmul.f32 %v300, %v302
    %v304 = vadd.f32 %v300, %v303
    %vm305 = vweird.f32 %v299
    %vm306 = vweird.f32 %v300
    %vm307 = vmor %vm305, %vm306
    %v308 = vsel %vm307, %v300, %v304
    %v309 = vand.u32 2147483647, %v299
    %vm310 = vcmp.eq.f32.partialorder %v309, 8.507059e+37
    %v311 = vand.u32 %v299, 2147483648
    %v312 = vor.u32 1.1754944e-38, %v311
    %v313 = vsel %vm310, %v312, %v308
    %v314 = vmul.f32 1.0, %v313
    %v315 = vxor.u32 %v214, 2147483648
    %v316 = vmul.f32 %v315, 1.442695
    %v317 = vpow.pop %v316
    %v318 = vadd.f32 %v317, 1.0
    %v319 = vrcp.pop %v318
    %v320 = vmul.f32 %v318, %v319
    %v321 = vsub.f32 1.0, %v320
    %v322 = vmul.f32 %v319, %v321
    %v323 = vadd.f32 %v319, %v322
    %vm324 = vweird.f32 %v318
    %vm325 = vweird.f32 %v319
    %vm326 = vmor %vm324, %vm325
    %v327 = vsel %vm326, %v319, %v323
    %v328 = vand.u32 2147483647, %v318
    %vm329 = vcmp.eq.f32.partialorder %v328, 8.507059e+37
    %v330 = vand.u32 %v318, 2147483648
    %v331 = vor.u32 1.1754944e-38, %v330
    %v332 = vsel %vm329, %v331, %v327
    %v333 = vmul.f32 1.0, %v332
    %v334 = vmul.f32 %v314, %v294
    %v335 = vadd.f32 %v254, %v334
    %v336 = vtanh.pop %v335
    %v337 = vld [vmem:[#allocation2] sm:$0xff]
    %v338 = vld [vmem:[%s1] sm:$0xff]
    %340 = vset.pattern.permute.xlu0 0
    %341 = vperm.xlu0 %340, %v338
    %v342 = vpop.permute.xlu0 %341
    %v344 = vmul.f32 %v342, %v333
    %v345 = vsub.f32 %v336, %v337
    %v346 = vmul.f32 %v344, %v345
    %v347 = vadd.f32 %v337, %v346
    %348 = vst [vmem:[#allocation7] sm:$0xff] %v347
    // Predicated region
    $region26: #{tpu_custom_call.1} parent=1 // pred_check
      _
    $region27: #{tpu_custom_call.1} parent=1 // pred_check_branch
      %350 = sbr.rel (0) target = $region29
    $region28: #{tpu_custom_call.1} parent=1 // pred_region
      %352 = vsyncadd [#allocation4], 0
      %s354 = sshll.u32 [#allocation7], 4
      %s355 = int_to_ptr.vmem [resolvable:$true] %s354
      %s356 = sshll.u32 %s4, 4
      %s357 = int_to_ptr.hbm [resolvable:$true] %s356
      %359 = dma.vmem_to_hbm [thread:$0]  %s355, 128, %s357, [#allocation4]
    $region29: #{tpu_custom_call.1} parent=1 // pred_fallthru
      _
    // Predicated region
    $region30: #{tpu_custom_call.1} parent=1 // pred_check
      _
    $region31: #{tpu_custom_call.1} parent=1 // pred_check_branch
      %361 = sbr.rel (0) target = $region33
    $region32: #{tpu_custom_call.1} parent=1 // pred_region
      %363 = dma.done [#allocation4], 128
    $region33: #{tpu_custom_call.1} parent=1 // pred_fallthru
      _
    %364 = vsyncpa [#allocation3], 1
    %365 = vsyncpa [#allocation6], 1
    %366 = vsyncpa [#allocation4], 1

</llo_original>
